<compile_context>
chip_gen: v6e
topology: v6e:2x2x1
jax: 0.10.0
libtpu: 0.0.40
codegen_flags: <defaults>
</compile_context>

<pallas_src>
import functools
import math

import jax
import jax.numpy as jnp
from jax.experimental import pallas as pl
from jax.experimental.pallas import tpu as pltpu


def _round_up(a, b):
    return ((a + b - 1) // b) * b


def _cdiv(a, b):
    return (a + b - 1) // b


_SQRT2_INV = 1.0 / math.sqrt(2.0)
_TANH_C = math.sqrt(2.0 / math.pi)


def _gelu(x, approx):
    if approx:
        # tanh approximation -> transcendental goes to the EUP slot (useful
        # when the VPU is the bottleneck, e.g. v5e). Changes numerics ~1e-3.
        return 0.5 * x * (1.0 + jnp.tanh(_TANH_C * (x + 0.044715 * x * x * x)))
    # PyTorch nn.GELU() / F.gelu default: exact (erf) formulation.
    return 0.5 * x * (1.0 + jax.lax.erf(x * _SQRT2_INV))


# ----------------------------------------------------------------------------
# Kernel
# ----------------------------------------------------------------------------
def _ff_kernel(*refs, glu, gelu_approx):
    """Fused FeedForward tile: proj-in matmul(s) + (GE)GLU + proj-out matmul.

    Grid is (m_tiles, k_tiles); k tiles the inner/hidden dimension and is a
    reduction axis accumulated into a resident f32 scratch.
    """
    if glu:
        (x_ref, wv_ref, bv_ref, wg_ref, bg_ref,
         w2_ref, b2_ref, o_ref, acc_ref) = refs
    else:
        x_ref, wv_ref, bv_ref, w2_ref, b2_ref, o_ref, acc_ref = refs
        wg_ref = bg_ref = None

    k = pl.program_id(1)

    @pl.when(k == 0)
    def _():
        acc_ref[...] = jnp.zeros_like(acc_ref)

    x = x_ref[...]
    # Projection-in for this k-slice of the hidden dim (MXU, f32 accumulate).
    h = (jnp.dot(x, wv_ref[...], preferred_element_type=jnp.float32)
         + bv_ref[...].astype(jnp.float32))
    if glu:
        g = (jnp.dot(x, wg_ref[...], preferred_element_type=jnp.float32)
             + bg_ref[...].astype(jnp.float32))
        act = h * _gelu(g, gelu_approx)          # elementwise stays in f32
    else:
        act = _gelu(h, gelu_approx)

    # Projection-out partial product for this k-slice, accumulated in f32.
    acc_ref[...] += jnp.dot(act.astype(w2_ref.dtype), w2_ref[...],
                            preferred_element_type=jnp.float32)

    @pl.when(k == pl.num_programs(1) - 1)
    def _():
        o_ref[...] = (acc_ref[...] + b2_ref[...].astype(jnp.float32)
                      ).astype(o_ref.dtype)


# ----------------------------------------------------------------------------
# One-time weight preprocessing (hoisted out of the forward path)
# ----------------------------------------------------------------------------
def prepare_feed_forward_params(params, *, glu, tile_k=512,
                                compute_dtype=jnp.bfloat16):
    """Split / pad / cast the FeedForward weights ONCE per layer.

    params = (w1, b1, w2, b2) with w1:(dim, P), b1:(1, P), w2:(inner, dim_out),
    b2:(1, dim_out), P = 2*inner if glu else inner.

    Zero-padding the hidden dim to a tile_k multiple is exact: padded columns
    produce act == 0 (gelu(0)=0 / val=0), contributing 0 to the output.
    """
    w1, b1, w2, b2 = params
    dim = w1.shape[0]
    inner_dim, dim_out = w2.shape

    tile_k = max(128, min(int(tile_k), _round_up(inner_dim, 128)))
    tile_k = _round_up(tile_k, 128)
    k_pad = _round_up(inner_dim, tile_k)

    def pad_cols(a, cols):
        if a.shape[1] != cols:
            a = jnp.pad(a, ((0, 0), (0, cols - a.shape[1])))
        return a

    if glu:
        w_val, w_gate = w1[:, :inner_dim], w1[:, inner_dim:]
        b_val, b_gate = b1[:, :inner_dim], b1[:, inner_dim:]
    else:
        w_val, b_val = w1, b1
        w_gate = b_gate = None

    w_val = pad_cols(w_val, k_pad).astype(compute_dtype)
    b_val = pad_cols(b_val, k_pad).astype(jnp.float32)
    if glu:
        w_gate = pad_cols(w_gate, k_pad).astype(compute_dtype)
        b_gate = pad_cols(b_gate, k_pad).astype(jnp.float32)
    w2p = w2
    if k_pad > inner_dim:
        w2p = jnp.pad(w2p, ((0, k_pad - inner_dim), (0, 0)))
    w2p = w2p.astype(compute_dtype)
    b2p = b2.astype(jnp.float32)

    return dict(glu=glu, tile_k=tile_k, k_pad=k_pad, dim=dim,
                dim_out=dim_out, compute_dtype=compute_dtype,
                w_val=w_val, b_val=b_val, w_gate=w_gate, b_gate=b_gate,
                w2=w2p, b2=b2p)


# ----------------------------------------------------------------------------
# VMEM budgeting / tile selection
# ----------------------------------------------------------------------------
def _vmem_budget_bytes():
    cap = 64 * 1024 * 1024  # conservative fallback (v7x per-TC capacity)
    try:
        info = pltpu.get_tpu_info()
        cap = int(getattr(info, "vmem_capacity_bytes", cap))
    except Exception:
        pass
    # Headroom for Mosaic internal scratch / compiler temporaries.
    return min(int(cap * 0.80), 100 * 1024 * 1024)


def _vmem_estimate(tile_m, tile_k, dim, dim_out, itemsize, glu):
    n_w1 = 2 if glu else 1
    per_step = (tile_m * dim                 # x tile
                + n_w1 * dim * tile_k        # w_val (+ w_gate)
                + tile_k * dim_out           # w2 slice
                + tile_m * dim_out) * itemsize   # output tile
    per_step += (n_w1 * tile_k + dim_out) * 4    # f32 biases
    dbuf = 2 * per_step                          # double-buffered pipeline
    acc = tile_m * dim_out * 4                   # resident f32 accumulator
    temps = (3 if glu else 2) * tile_m * tile_k * 4   # h/g/act f32 temporaries
    return dbuf + acc + temps


# ----------------------------------------------------------------------------
# Forward call
# ----------------------------------------------------------------------------
def feed_forward_pallas(x, prepared, *, tile_m=1024, gelu_approx=False,
                        vmem_limit_bytes=None):
    """x: (B, N, dim). prepared: output of prepare_feed_forward_params()."""
    glu = prepared["glu"]
    tile_k = prepared["tile_k"]
    k_pad = prepared["k_pad"]
    dim = prepared["dim"]
    dim_out = prepared["dim_out"]
    cdt = prepared["compute_dtype"]

    B, N, x_dim = x.shape
    assert x_dim == dim, f"x last dim {x_dim} != weight dim {dim}"
    M = B * N
    itemsize = jnp.dtype(cdt).itemsize

    # Native sublane packing for the compute dtype: (8,128) f32, (16,128) bf16.
    if itemsize >= 4:
        pack = 8
    elif itemsize == 2:
        pack = 16
    else:
        pack = 32

    # ---- row (M) tiling: no padding of x; last m-block may be ragged. ----
    tile_m = max(pack, min(int(tile_m), _round_up(M, pack)))
    tile_m = _round_up(tile_m, pack)

    budget = int(vmem_limit_bytes) if vmem_limit_bytes else _vmem_budget_bytes()
    # Shrink tile_m (halving) until the per-step residency fits the budget
    # (keeps the same code working on v7x's 64 MiB/TC and v5e/v6e's 128 MiB).
    while (tile_m > pack and
           _vmem_estimate(tile_m, tile_k, dim, dim_out, itemsize, glu)
           > budget):
        tile_m = max(pack, _round_up(tile_m // 2, pack))

    # Megacore balance: don't collapse to a single m-tile when M is large
    # enough to split across two TensorCores (v7x).
    if _cdiv(M, tile_m) == 1 and M > 2 * pack:
        tile_m = max(pack, _round_up(_cdiv(M, 2), pack))

    grid = (_cdiv(M, tile_m), k_pad // tile_k)

    x2 = x.reshape(M, dim).astype(cdt)

    x_spec = pl.BlockSpec((tile_m, dim), lambda i, k: (i, 0))
    wv_spec = pl.BlockSpec((dim, tile_k), lambda i, k: (0, k))
    bv_spec = pl.BlockSpec((1, tile_k), lambda i, k: (0, k))
    w2_spec = pl.BlockSpec((tile_k, dim_out), lambda i, k: (k, 0))
    b2_spec = pl.BlockSpec((1, dim_out), lambda i, k: (0, 0))
    out_spec = pl.BlockSpec((tile_m, dim_out), lambda i, k: (i, 0))

    if glu:
        in_specs = [x_spec, wv_spec, bv_spec,
                    pl.BlockSpec((dim, tile_k), lambda i, k: (0, k)),
                    pl.BlockSpec((1, tile_k), lambda i, k: (0, k)),
                    w2_spec, b2_spec]
        args = (x2, prepared["w_val"], prepared["b_val"],
                prepared["w_gate"], prepared["b_gate"],
                prepared["w2"], prepared["b2"])
    else:
        in_specs = [x_spec, wv_spec, bv_spec, w2_spec, b2_spec]
        args = (x2, prepared["w_val"], prepared["b_val"],
                prepared["w2"], prepared["b2"])

    kernel = functools.partial(_ff_kernel, glu=glu, gelu_approx=gelu_approx)

    grid_spec = pltpu.PrefetchScalarGridSpec(
        num_scalar_prefetch=0,
        grid=grid,
        in_specs=in_specs,
        out_specs=out_spec,
        scratch_shapes=[pltpu.VMEM((tile_m, dim_out), jnp.float32)],
    )

    out2 = pl.pallas_call(
        kernel,
        out_shape=jax.ShapeDtypeStruct((M, dim_out), x.dtype),
        grid_spec=grid_spec,
        compiler_params=pltpu.CompilerParams(
            dimension_semantics=("parallel", "arbitrary"),
            vmem_limit_bytes=budget),
    )(*args)

    return out2.reshape(B, N, dim_out)


def feed_forward(x, params, *, glu, tile_m=1024, tile_k=512,
                 compute_dtype=jnp.bfloat16, gelu_approx=False):
    """Convenience one-shot wrapper (prepares params every call; prefer
    prepare_feed_forward_params() once + feed_forward_pallas() per call)."""
    prepared = prepare_feed_forward_params(
        params, glu=glu, tile_k=tile_k, compute_dtype=compute_dtype)
    return feed_forward_pallas(x, prepared, tile_m=tile_m,
                               gelu_approx=gelu_approx)


# ----------------------------------------------------------------------------
# Reference + init
# ----------------------------------------------------------------------------
def feed_forward_ref(x, params, *, glu):
    """Pure-JAX reference with identical semantics (dropout p=0)."""
    w1, b1, w2, b2 = params
    h = x @ w1 + b1
    if glu:
        val, gate = jnp.split(h, 2, axis=-1)
        act = val * _gelu(gate, approx=False)
    else:
        act = _gelu(h, approx=False)
    return act @ w2 + b2


def init_feed_forward_params(key, dim, dim_out=None, mult=4, glu=False,
                             dtype=jnp.float32):
    """Deterministic PyTorch-Linear-style init (uniform +/- 1/sqrt(fan_in))."""
    inner_dim = int(dim * mult)
    dim_out = dim if dim_out is None else dim_out
    proj_out = inner_dim * 2 if glu else inner_dim
    k1, k2, k3, k4 = jax.random.split(key, 4)
    bound1 = 1.0 / math.sqrt(dim)
    bound2 = 1.0 / math.sqrt(inner_dim)
    w1 = jax.random.uniform(k1, (dim, proj_out), dtype, -bound1, bound1)
    b1 = jax.random.uniform(k2, (1, proj_out), dtype, -bound1, bound1)
    w2 = jax.random.uniform(k3, (inner_dim, dim_out), dtype, -bound2, bound2)
    b2 = jax.random.uniform(k4, (1, dim_out), dtype, -bound2, bound2)
    return (w1, b1, w2, b2)


if __name__ == "__main__":
    key = jax.random.PRNGKey(0)
    kx, kp1, kp2, kx2 = jax.random.split(key, 4)

    B, N, dim, mult = 2, 8, 32, 4  # inner_dim = 128
    x = jax.random.normal(kx, (B, N, dim), jnp.float32)

    # Path 1: default FeedForward (glu=False), f32 compute -> tight tolerance.
    params_plain = init_feed_forward_params(kp1, dim, mult=mult, glu=False)
    prep_plain_f32 = prepare_feed_forward_params(
        params_plain, glu=False, compute_dtype=jnp.float32)
    out_plain = feed_forward_pallas(x, prep_plain_f32)
    jax.block_until_ready(out_plain)
    ref_plain = feed_forward_ref(x, params_plain, glu=False)
    assert out_plain.shape == (B, N, dim)
    assert jnp.allclose(out_plain, ref_plain, atol=1e-5, rtol=1e-5)

    # Path 2: GEGLU variant (glu=True), f32 compute -> tight tolerance.
    params_glu = init_feed_forward_params(kp2, dim, mult=mult, glu=True)
    prep_glu_f32 = prepare_feed_forward_params(
        params_glu, glu=True, compute_dtype=jnp.float32)
    out_glu = feed_forward_pallas(x, prep_glu_f32)
    jax.block_until_ready(out_glu)
    ref_glu = feed_forward_ref(x, params_glu, glu=True)
    assert out_glu.shape == (B, N, dim)
    assert jnp.allclose(out_glu, ref_glu, atol=1e-5, rtol=1e-5)

    # Path 3: odd row count -> exercises the ragged (unpadded) last m-block.
    x_odd = jax.random.normal(kx2, (1, 5, dim), jnp.float32)
    out_odd = feed_forward_pallas(x_odd, prep_glu_f32)
    jax.block_until_ready(out_odd)
    ref_odd = feed_forward_ref(x_odd, params_glu, glu=True)
    assert out_odd.shape == (1, 5, dim)
    assert jnp.allclose(out_odd, ref_odd, atol=1e-5, rtol=1e-5)

    # Path 4: default bf16 compute (MXU-peak configuration), f32 accumulation.
    prep_glu_bf16 = prepare_feed_forward_params(
        params_glu, glu=True, compute_dtype=jnp.bfloat16)
    out_bf16 = feed_forward_pallas(x, prep_glu_bf16)
    jax.block_until_ready(out_bf16)
    assert out_bf16.shape == (B, N, dim)
    assert jnp.allclose(out_bf16, ref_glu, atol=1e-1, rtol=1e-1)

    # Path 5: tanh-approx GELU option (EUP path for VALU-bound v5e configs).
    out_tanh = feed_forward_pallas(x, prep_glu_f32, gelu_approx=True)
    jax.block_until_ready(out_tanh)
    assert jnp.allclose(out_tanh, ref_glu, atol=5e-2, rtol=5e-2)

    print("KERNEL_OK")
</pallas_src>

<mosaic_0001>
module attributes {stable_mosaic.version = 11 : i64} {
  func.func @_ff_kernel(%arg0: i32, %arg1: i32, %arg2: memref<16x32xf32, #tpu.memory_space<vmem>>, %arg3: memref<32x128xf32, #tpu.memory_space<vmem>>, %arg4: memref<1x128xf32, #tpu.memory_space<vmem>>, %arg5: memref<128x32xf32, #tpu.memory_space<vmem>>, %arg6: memref<1x32xf32, #tpu.memory_space<vmem>>, %arg7: memref<16x32xf32, #tpu.memory_space<vmem>>, %arg8: memref<16x32xf32, #tpu.memory_space<vmem>>) attributes {dimension_semantics = [#tpu.dimension_semantics<parallel>, #tpu.dimension_semantics<arbitrary>], iteration_bounds = array<i64: 1, 1>, scalar_prefetch = 0 : i64, scratch_operands = 1 : i64, tpu.core_type = #tpu.core_type<tc>, window_params = [{transform_indices = @transform_0, window_bounds = array<i64: 16, 32>}, {transform_indices = @transform_1, window_bounds = array<i64: 32, 128>}, {transform_indices = @transform_2, window_bounds = array<i64: 1, 128>}, {transform_indices = @transform_3, window_bounds = array<i64: 128, 32>}, {pipeline_mode = #tpu.pipeline_mode<synchronous>, transform_indices = @transform_4, window_bounds = array<i64: 1, 32>}, {transform_indices = @transform_5, window_bounds = array<i64: 16, 32>}]} {
    %c0_i32 = arith.constant 0 : i32
    %0 = arith.cmpi eq, %arg1, %c0_i32 : i32
    %1 = arith.extui %0 : i1 to i32
    %c0_i32_0 = arith.constant 0 : i32
    %2 = arith.cmpi ne, %1, %c0_i32_0 : i32
    scf.if %2 {
      %cst_18 = arith.constant 0.000000e+00 : f32
      %25 = vector.broadcast %cst_18 : f32 to vector<16x32xf32>
      %c0_19 = arith.constant 0 : index
      %c0_20 = arith.constant 0 : index
      %26 = vector.load %arg8[%c0_19, %c0_20] : memref<16x32xf32, #tpu.memory_space<vmem>>, vector<16x32xf32>
      tpu.vector_store %arg8[%c0_19, %c0_20], %25 {strides = array<i32>} : memref<16x32xf32, #tpu.memory_space<vmem>>, vector<16x32xf32>,
    } else {
    }
    %c0 = arith.constant 0 : index
    %c0_1 = arith.constant 0 : index
    %3 = vector.load %arg2[%c0, %c0_1] : memref<16x32xf32, #tpu.memory_space<vmem>>, vector<16x32xf32>
    %c0_2 = arith.constant 0 : index
    %c0_3 = arith.constant 0 : index
    %4 = vector.load %arg3[%c0_2, %c0_3] : memref<32x128xf32, #tpu.memory_space<vmem>>, vector<32x128xf32>
    %cst = arith.constant dense<0.000000e+00> : vector<16x128xf32>
    %5 = tpu.matmul %3, %4, %cst {dimension_numbers = #tpu.dot_dimension_numbers<[1], [0], [0], [1], [0, 0, 1, 1], [], []>} : vector<16x32xf32>, vector<32x128xf32>, vector<16x128xf32> -> vector<16x128xf32>
    %c0_4 = arith.constant 0 : index
    %c0_5 = arith.constant 0 : index
    %6 = vector.load %arg4[%c0_4, %c0_5] : memref<1x128xf32, #tpu.memory_space<vmem>>, vector<1x128xf32>
    %7 = vector.broadcast %6 : vector<1x128xf32> to vector<16x128xf32>
    %8 = arith.addf %5, %7 : vector<16x128xf32>
    %cst_6 = arith.constant 5.000000e-01 : f32
    %9 = vector.broadcast %cst_6 : f32 to vector<16x128xf32>
    %10 = arith.mulf %9, %8 : vector<16x128xf32>
    %cst_7 = arith.constant 0.707106769 : f32
    %11 = vector.broadcast %cst_7 : f32 to vector<16x128xf32>
    %12 = arith.mulf %8, %11 : vector<16x128xf32>
    %13 = math.erf %12 : vector<16x128xf32>
    %cst_8 = arith.constant 1.000000e+00 : f32
    %14 = vector.broadcast %cst_8 : f32 to vector<16x128xf32>
    %15 = arith.addf %14, %13 : vector<16x128xf32>
    %16 = arith.mulf %10, %15 : vector<16x128xf32>
    %c0_9 = arith.constant 0 : index
    %c0_10 = arith.constant 0 : index
    %17 = vector.load %arg8[%c0_9, %c0_10] : memref<16x32xf32, #tpu.memory_space<vmem>>, vector<16x32xf32>
    %c0_11 = arith.constant 0 : index
    %c0_12 = arith.constant 0 : index
    %18 = vector.load %arg5[%c0_11, %c0_12] : memref<128x32xf32, #tpu.memory_space<vmem>>, vector<128x32xf32>
    %cst_13 = arith.constant dense<0.000000e+00> : vector<16x32xf32>
    %19 = tpu.matmul %16, %18, %cst_13 {dimension_numbers = #tpu.dot_dimension_numbers<[1], [0], [0], [1], [0, 0, 1, 1], [], []>} : vector<16x128xf32>, vector<128x32xf32>, vector<16x32xf32> -> vector<16x32xf32>
    %20 = arith.addf %17, %19 : vector<16x32xf32>
    %c0_14 = arith.constant 0 : index
    %c0_15 = arith.constant 0 : index
    %21 = vector.load %arg8[%c0_14, %c0_15] : memref<16x32xf32, #tpu.memory_space<vmem>>, vector<16x32xf32>
    tpu.vector_store %arg8[%c0_14, %c0_15], %20 {strides = array<i32>} : memref<16x32xf32, #tpu.memory_space<vmem>>, vector<16x32xf32>,
    %c0_i32_16 = arith.constant 0 : i32
    %22 = arith.cmpi eq, %arg1, %c0_i32_16 : i32
    %23 = arith.extui %22 : i1 to i32
    %c0_i32_17 = arith.constant 0 : i32
    %24 = arith.cmpi ne, %23, %c0_i32_17 : i32
    scf.if %24 {
      %c0_18 = arith.constant 0 : index
      %c0_19 = arith.constant 0 : index
      %25 = vector.load %arg8[%c0_18, %c0_19] : memref<16x32xf32, #tpu.memory_space<vmem>>, vector<16x32xf32>
      %c0_20 = arith.constant 0 : index
      %c0_21 = arith.constant 0 : index
      %26 = vector.load %arg6[%c0_20, %c0_21] : memref<1x32xf32, #tpu.memory_space<vmem>>, vector<1x32xf32>
      %27 = vector.broadcast %26 : vector<1x32xf32> to vector<16x32xf32>
      %28 = arith.addf %25, %27 : vector<16x32xf32>
      %c0_22 = arith.constant 0 : index
      %c0_23 = arith.constant 0 : index
      %29 = vector.load %arg7[%c0_22, %c0_23] : memref<16x32xf32, #tpu.memory_space<vmem>>, vector<16x32xf32>
      tpu.vector_store %arg7[%c0_22, %c0_23], %28 {strides = array<i32>} : memref<16x32xf32, #tpu.memory_space<vmem>>, vector<16x32xf32>,
    } else {
    }
    return
  }
  func.func @transform_0(%arg0: i32, %arg1: i32) -> (i32, i32) {
    %c0_i32 = arith.constant 0 : i32
    %c0_i32_0 = arith.constant 0 : i32
    return %arg0, %c0_i32 : i32, i32
  }
  func.func @transform_1(%arg0: i32, %arg1: i32) -> (i32, i32) {
    %c0_i32 = arith.constant 0 : i32
    %c0_i32_0 = arith.constant 0 : i32
    return %c0_i32, %arg1 : i32, i32
  }
  func.func @transform_2(%arg0: i32, %arg1: i32) -> (i32, i32) {
    %c0_i32 = arith.constant 0 : i32
    %c0_i32_0 = arith.constant 0 : i32
    return %c0_i32, %arg1 : i32, i32
  }
  func.func @transform_3(%arg0: i32, %arg1: i32) -> (i32, i32) {
    %c0_i32 = arith.constant 0 : i32
    %c0_i32_0 = arith.constant 0 : i32
    return %arg1, %c0_i32 : i32, i32
  }
  func.func @transform_4(%arg0: i32, %arg1: i32) -> (i32, i32) {
    %c0_i32 = arith.constant 0 : i32
    %c0_i32_0 = arith.constant 0 : i32
    %c0_i32_1 = arith.constant 0 : i32
    return %c0_i32, %c0_i32_0 : i32, i32
  }
  func.func @transform_5(%arg0: i32, %arg1: i32) -> (i32, i32) {
    %c0_i32 = arith.constant 0 : i32
    %c0_i32_0 = arith.constant 0 : i32
    return %arg0, %c0_i32 : i32, i32
  }
}

</mosaic_0001>

<llo_original>
// kernel: tpu_custom_call.1
$region0: #{tpu_custom_call.1}
  #allocation0 [shape = 'u32[]', space=smem, size = 0x4, offset = 0x4, fixed_abs, tag = 'smem constant byte address 0x4 - core index']
  #allocation1 [shape = 'u32[144,128]{1,0:T(1,128)}', space=vmem, size = 0x12000, scoped, tag = 'internal scratch']
  #allocation2 [shape = 'f32[16,32]{1,0:T(8,128)}', space=vmem, size = 0x2000, scoped, tag = 'scratch operand']
  %s0 = inlined_call_operand.vmem [shape: f32[16,32], index: 0, kind: input, shape index: {}]
  %s1 = inlined_call_operand.vmem [shape: f32[32,128], index: 1, kind: input, shape index: {}]
  %s2 = inlined_call_operand.vmem [shape: f32[1,128], index: 2, kind: input, shape index: {}]
  %s3 = inlined_call_operand.vmem [shape: f32[128,32], index: 3, kind: input, shape index: {}]
  %s4 = inlined_call_operand.vmem [shape: f32[1,32], index: 4, kind: input, shape index: {}]
  %s5 = inlined_call_operand.hbm [shape: f32[16,32], index: 5, kind: output, shape index: {}]
  %s6 = sld [smem:[#allocation0]]
  $region38: #{tpu_custom_call.1} parent=0
    _
  %s8 = ssub.s32 1, %s6
  %s9 = scalar_select 0, %s8, %s6
  $region1: #{tpu_custom_call.1} parent=0
    #allocation3 [shape = 'u8[8192]{0}', space=vmem, size = 0x2000, scoped, tag = 'output window, operand 0, single buffered']
    #allocation4 [shape = 's32[1]{0}', space=sflag, size = 0x4, scoped, tag = 'scoped memory for tpu_custom_call.1']
    %10 = vsyncpa [#allocation4], 0
    // Predicated region
    $region2: #{tpu_custom_call.1} parent=1 // pred_check
      _
    $region3: #{tpu_custom_call.1} parent=1 // pred_check_branch
      %12 = sbr.rel (0) target = $region5
    $region4: #{tpu_custom_call.1} parent=1 // pred_region
      _
    $region5: #{tpu_custom_call.1} parent=1 // pred_fallthru
      _
    // Predicated region
    $region6: #{tpu_custom_call.1} parent=1 // pred_check
      _
    $region7: #{tpu_custom_call.1} parent=1 // pred_check_branch
      %14 = sbr.rel (0) target = $region9
    $region8: #{tpu_custom_call.1} parent=1 // pred_region
      _
    $region9: #{tpu_custom_call.1} parent=1 // pred_fallthru
      _
    // Predicated region
    $region10: #{tpu_custom_call.1} parent=1 // pred_check
      _
    $region11: #{tpu_custom_call.1} parent=1 // pred_check_branch
      %16 = sbr.rel (0) target = $region13
    $region12: #{tpu_custom_call.1} parent=1 // pred_region
      _
    $region13: #{tpu_custom_call.1} parent=1 // pred_fallthru
      _
    // Predicated region
    $region14: #{tpu_custom_call.1} parent=1 // pred_check
      _
    $region15: #{tpu_custom_call.1} parent=1 // pred_check_branch
      %18 = sbr.rel (0) target = $region17
    $region16: #{tpu_custom_call.1} parent=1 // pred_region
      _
    $region17: #{tpu_custom_call.1} parent=1 // pred_fallthru
      _
    // Predicated region
    $region18: #{tpu_custom_call.1} parent=1 // pred_check
      _
    $region19: #{tpu_custom_call.1} parent=1 // pred_check_branch
      %20 = sbr.rel (0) target = $region21
    $region20: #{tpu_custom_call.1} parent=1 // pred_region
      _
    $region21: #{tpu_custom_call.1} parent=1 // pred_fallthru
      _
    %p21 = scmp.eq.s32.totalorder 0, 0
    // Predicated region
    $region22: #{tpu_custom_call.1} parent=1 // pred_check
      %p22 = pneg %p21
    $region23: #{tpu_custom_call.1} parent=1 // pred_check_branch
      %24 = sbr.rel (%p22) target = $region25
    $region24: #{tpu_custom_call.1} parent=1 // pred_region
      %vm25 = vcmask 261120
      %26 = vst.msk [vmem:[#allocation2] sm:$0xff] %vm25, 0.0
      %27 = vst.msk [vmem:[#allocation2 + $0x8] sm:$0xff] %vm25, 0.0
    $region25: #{tpu_custom_call.1} parent=1 // pred_fallthru
      _
    %v28 = vld [vmem:[%s0] sm:$0xff]
    %v29 = vld [vmem:[%s0 + $0x8] sm:$0xff]
    %v30 = vld [vmem:[%s1] sm:$0xff]
    %v31 = vld [vmem:[%s1 + $0x8] sm:$0xff]
    %v32 = vld [vmem:[%s1 + $0x10] sm:$0xff]
    %v33 = vld [vmem:[%s1 + $0x18] sm:$0xff]
    %v34 = vld [vmem:[%s2] sm:$0x1]
    %v36 = vlaneseq
    %v37 = vshrl.u32 %v36, 7
    %v38 = vsub.s32 0, %v37
    %v39 = vrot.slane %v34, %v38
    %vm41 = vcmask 261120
    %v43 = vsel %vm41, %v28, 0
    %v46 = vsel %vm41, %v29, 0
    %48 = vmatprep.subr.mxu0 0.0
    %49 = vmatpush1.msra.mxu0 0.0
    %50 = vmatprep.subr.mxu0 0.0
    %51 = vmatpush1.msra.mxu0 0.0
    %52 = vmatprep.subr.mxu0 0.0
    %53 = vmatpush1.msra.mxu0 0.0
    %54 = vmatprep.subr.mxu0 0.0
    %55 = vmatpush1.msra.mxu0 0.0
    %56 = vmatprep.subr.mxu0 0.0
    %57 = vmatpush1.msra.mxu0 0.0
    %58 = vmatprep.subr.mxu0 0.0
    %59 = vmatpush1.msra.mxu0 0.0
    %60 = vmatprep.subr.mxu0 0.0
    %61 = vmatpush1.msra.mxu0 0.0
    %62 = vmatprep.subr.mxu0 0.0
    %63 = vmatpush1.msra.mxu0 0.0
    %64 = vmatprep.subr.mxu0 0.0
    %65 = vmatpush1.msra.mxu0 0.0
    %66 = vmatprep.subr.mxu0 0.0
    %67 = vmatpush1.msra.mxu0 0.0
    %68 = vmatprep.subr.mxu0 0.0
    %69 = vmatpush1.msra.mxu0 0.0
    %70 = vmatprep.subr.mxu0 0.0
    %71 = vmatpush1.msra.mxu0 0.0
    %72 = vmatprep.subr.mxu0 0.0
    %73 = vmatpush1.msra.mxu0 %v33
    %74 = vmatprep.subr.mxu0 0.0
    %75 = vmatpush1.msra.mxu0 %v32
    %76 = vmatprep.subr.mxu0 0.0
    %77 = vmatpush1.msra.mxu0 %v31
    %78 = vmatprep.subr.mxu0 0.0
    %79 = vmatpush1.msra.mxu0 %v30
    %80 = vmatprep.subr.mxu0 0.0
    %81 = vmatpush2.msra.mxu0 0.0
    %82 = vmatprep.subr.mxu0 0.0
    %83 = vmatpush2.msra.mxu0 0.0
    %84 = vmatprep.subr.mxu0 0.0
    %85 = vmatpush2.msra.mxu0 0.0
    %86 = vmatprep.subr.mxu0 0.0
    %87 = vmatpush2.msra.mxu0 0.0
    %88 = vmatprep.subr.mxu0 0.0
    %89 = vmatpush2.msra.mxu0 0.0
    %90 = vmatprep.subr.mxu0 0.0
    %91 = vmatpush2.msra.mxu0 0.0
    %92 = vmatprep.subr.mxu0 0.0
    %93 = vmatpush2.msra.mxu0 0.0
    %94 = vmatprep.subr.mxu0 0.0
    %95 = vmatpush2.msra.mxu0 0.0
    %96 = vmatprep.subr.mxu0 0.0
    %97 = vmatpush2.msra.mxu0 0.0
    %98 = vmatprep.subr.mxu0 0.0
    %99 = vmatpush2.msra.mxu0 0.0
    %100 = vmatprep.subr.mxu0 0.0
    %101 = vmatpush2.msra.mxu0 0.0
    %102 = vmatprep.subr.mxu0 0.0
    %103 = vmatpush2.msra.mxu0 0.0
    %104 = vmatprep.subr.mxu0 0.0
    %105 = vmatpush2.msra.mxu0 0.0
    %106 = vmatprep.subr.mxu0 0.0
    %107 = vmatpush2.msra.mxu0 0.0
    %108 = vmatprep.subr.mxu0 0.0
    %109 = vmatpush2.msra.mxu0 0.0
    %110 = vmatprep.subr.mxu0 0.0
    %111 = vmatpush2.msra.mxu0 0.0
    %112 = vmatprep.mubr.f32.mxu0 0.0
    %113 = vmatmul.mubr.f32.gmra.mxu0 %v43
    %v114 = vpop.f32.mrf.mxu0
    %v115 = vadd.f32 %v39, %v114
    %v116 = vpop.f32.mrf.mxu0
    %117 = vmatprep.mubr.f32.mxu0 0.0
    %118 = vmatmul.mubr.f32.gmra.mxu0 %v46
    %v119 = vpop.f32.mrf.mxu0
    %v120 = vadd.f32 %v39, %v119
    %v121 = vpop.f32.mrf.mxu0
    %122 = vdwg.mxu0
    %v123 = vmul.f32 %v115, 0.5
    %v124 = vmul.f32 %v120, 0.5
    %v125 = vmul.f32 %v115, 0.70710677
    %v126 = vmul.f32 %v120, 0.70710677
    %v127 = verf.f32.pop %v125
    %v128 = verf.f32.pop %v126
    %v129 = vadd.f32 %v127, 1.0
    %v130 = vadd.f32 %v128, 1.0
    %v131 = vmul.f32 %v123, %v129
    %v132 = vmul.f32 %v124, %v130
    %v133 = vld [vmem:[#allocation2] sm:$0xff]
    %v134 = vld [vmem:[#allocation2 + $0x8] sm:$0xff]
    %v135 = vld [vmem:[%s3] sm:$0xff]
    %v136 = vld [vmem:[%s3 + $0x8] sm:$0xff]
    %v137 = vld [vmem:[%s3 + $0x10] sm:$0xff]
    %v138 = vld [vmem:[%s3 + $0x18] sm:$0xff]
    %v139 = vld [vmem:[%s3 + $0x20] sm:$0xff]
    %v140 = vld [vmem:[%s3 + $0x28] sm:$0xff]
    %v141 = vld [vmem:[%s3 + $0x30] sm:$0xff]
    %v142 = vld [vmem:[%s3 + $0x38] sm:$0xff]
    %v143 = vld [vmem:[%s3 + $0x40] sm:$0xff]
    %v144 = vld [vmem:[%s3 + $0x48] sm:$0xff]
    %v145 = vld [vmem:[%s3 + $0x50] sm:$0xff]
    %v146 = vld [vmem:[%s3 + $0x58] sm:$0xff]
    %v147 = vld [vmem:[%s3 + $0x60] sm:$0xff]
    %v148 = vld [vmem:[%s3 + $0x68] sm:$0xff]
    %v149 = vld [vmem:[%s3 + $0x70] sm:$0xff]
    %v150 = vld [vmem:[%s3 + $0x78] sm:$0xff]
    %151 = vmatprep.subr.mxu0 0.0
    %152 = vmatpush1.msra.mxu0 %v150
    %153 = vmatprep.subr.mxu0 0.0
    %154 = vmatpush1.msra.mxu0 %v149
    %155 = vmatprep.subr.mxu0 0.0
    %156 = vmatpush1.msra.mxu0 %v148
    %157 = vmatprep.subr.mxu0 0.0
    %158 = vmatpush1.msra.mxu0 %v147
    %159 = vmatprep.subr.mxu0 0.0
    %160 = vmatpush1.msra.mxu0 %v146
    %161 = vmatprep.subr.mxu0 0.0
    %162 = vmatpush1.msra.mxu0 %v145
    %163 = vmatprep.subr.mxu0 0.0
    %164 = vmatpush1.msra.mxu0 %v144
    %165 = vmatprep.subr.mxu0 0.0
    %166 = vmatpush1.msra.mxu0 %v143
    %167 = vmatprep.subr.mxu0 0.0
    %168 = vmatpush1.msra.mxu0 %v142
    %169 = vmatprep.subr.mxu0 0.0
    %170 = vmatpush1.msra.mxu0 %v141
    %171 = vmatprep.subr.mxu0 0.0
    %172 = vmatpush1.msra.mxu0 %v140
    %173 = vmatprep.subr.mxu0 0.0
    %174 = vmatpush1.msra.mxu0 %v139
    %175 = vmatprep.subr.mxu0 0.0
    %176 = vmatpush1.msra.mxu0 %v138
    %177 = vmatprep.subr.mxu0 0.0
    %178 = vmatpush1.msra.mxu0 %v137
    %179 = vmatprep.subr.mxu0 0.0
    %180 = vmatpush1.msra.mxu0 %v136
    %181 = vmatprep.subr.mxu0 0.0
    %182 = vmatpush1.msra.mxu0 %v135
    %183 = vmatprep.subr.mxu0 0.0
    %184 = vmatpush2.msra.mxu0 0.0
    %185 = vmatprep.subr.mxu0 0.0
    %186 = vmatpush2.msra.mxu0 0.0
    %187 = vmatprep.subr.mxu0 0.0
    %188 = vmatpush2.msra.mxu0 0.0
    %189 = vmatprep.subr.mxu0 0.0
    %190 = vmatpush2.msra.mxu0 0.0
    %191 = vmatprep.subr.mxu0 0.0
    %192 = vmatpush2.msra.mxu0 0.0
    %193 = vmatprep.subr.mxu0 0.0
    %194 = vmatpush2.msra.mxu0 0.0
    %195 = vmatprep.subr.mxu0 0.0
    %196 = vmatpush2.msra.mxu0 0.0
    %197 = vmatprep.subr.mxu0 0.0
    %198 = vmatpush2.msra.mxu0 0.0
    %199 = vmatprep.subr.mxu0 0.0
    %200 = vmatpush2.msra.mxu0 0.0
    %201 = vmatprep.subr.mxu0 0.0
    %202 = vmatpush2.msra.mxu0 0.0
    %203 = vmatprep.subr.mxu0 0.0
    %204 = vmatpush2.msra.mxu0 0.0
    %205 = vmatprep.subr.mxu0 0.0
    %206 = vmatpush2.msra.mxu0 0.0
    %207 = vmatprep.subr.mxu0 0.0
    %208 = vmatpush2.msra.mxu0 0.0
    %209 = vmatprep.subr.mxu0 0.0
    %210 = vmatpush2.msra.mxu0 0.0
    %211 = vmatprep.subr.mxu0 0.0
    %212 = vmatpush2.msra.mxu0 0.0
    %213 = vmatprep.subr.mxu0 0.0
    %214 = vmatpush2.msra.mxu0 0.0
    %215 = vmatprep.mubr.f32.mxu0 0.0
    %216 = vmatmul.mubr.f32.gmra.mxu0 %v131
    %v217 = vpop.f32.mrf.mxu0
    %v218 = vadd.f32 0.0, %v217
    %v219 = vpop.f32.mrf.mxu0
    %220 = vmatprep.mubr.f32.mxu0 0.0
    %221 = vmatmul.mubr.f32.gmra.mxu0 %v132
    %v222 = vpop.f32.mrf.mxu0
    %v223 = vadd.f32 0.0, %v222
    %v224 = vpop.f32.mrf.mxu0
    %225 = vdwg.mxu0
    %v226 = vadd.f32 %v133, %v218
    %v227 = vadd.f32 %v134, %v223
    %228 = vst.msk [vmem:[#allocation2] sm:$0xff] %vm41, %v226
    %229 = vst.msk [vmem:[#allocation2 + $0x8] sm:$0xff] %vm41, %v227
    // Predicated region
    $region26: #{tpu_custom_call.1} parent=1 // pred_check
      %p230 = pneg %p21
    $region27: #{tpu_custom_call.1} parent=1 // pred_check_branch
      %232 = sbr.rel (%p230) target = $region29
    $region28: #{tpu_custom_call.1} parent=1 // pred_region
      %v233 = vld [vmem:[#allocation2] sm:$0xff]
      %v234 = vld [vmem:[#allocation2 + $0x8] sm:$0xff]
      %v235 = vld [vmem:[%s4] sm:$0x1]
      %v237 = vlaneseq
      %v238 = vshrl.u32 %v237, 7
      %v239 = vsub.s32 0, %v238
      %v240 = vrot.slane %v235, %v239
      %v242 = vadd.f32 %v233, %v240
      %v243 = vadd.f32 %v234, %v240
      %244 = vst.msk [vmem:[#allocation3] sm:$0xff] %vm41, %v242
      %245 = vst.msk [vmem:[#allocation3 + $0x8] sm:$0xff] %vm41, %v243
    $region29: #{tpu_custom_call.1} parent=1 // pred_fallthru
      _
    // Predicated region
    $region30: #{tpu_custom_call.1} parent=1 // pred_check
      _
    $region31: #{tpu_custom_call.1} parent=1 // pred_check_branch
      %247 = sbr.rel (0) target = $region33
    $region32: #{tpu_custom_call.1} parent=1 // pred_region
      %s249 = ssub.s32 256, 256
      %250 = vsyncadd [#allocation4], %s249
      %s251 = sshll.u32 [#allocation3], 4
      %s252 = int_to_ptr.vmem [resolvable:$true] %s251
      %257 = dma.vmem_to_hbm [thread:$0]  %s252, 256, %s5, [#allocation4], 128, 128, 8
    $region33: #{tpu_custom_call.1} parent=1 // pred_fallthru
      _
    // Predicated region
    $region34: #{tpu_custom_call.1} parent=1 // pred_check
      _
    $region35: #{tpu_custom_call.1} parent=1 // pred_check_branch
      %259 = sbr.rel (0) target = $region37
    $region36: #{tpu_custom_call.1} parent=1 // pred_region
      %260 = dma.done [#allocation4], 256
    $region37: #{tpu_custom_call.1} parent=1 // pred_fallthru
      _
    %261 = vsyncpa [#allocation4], 1

</llo_original>
